<compile_context>
chip_gen: v5e
topology: v5e:2x2
jax: 0.10.0
libtpu: 0.0.40
codegen_flags: <defaults>
</compile_context>

<pallas_src>
import math

import numpy as np
import jax
import jax.numpy as jnp
from jax.experimental import pallas as pl
from jax.experimental.pallas import tpu as pltpu


def _gconv_kernel(x_ref, w_ref, adj_ref, d_ref, b_ref, o_ref):
    # x_ref:   (Bt*J, Fin)   flattened batch tile of inputs
    # w_ref:   (Fin, 2*Fout) [W0 | W1] concatenated along the output-feature axis
    # adj_ref: (J, J)        row-softmaxed adjacency (batch-invariant, precomputed)
    # d_ref:   (J, 1)        diag(adj)
    # b_ref:   (1, Fout)     bias row
    # o_ref:   (Bt, Fout, J) output, already in the module's transposed layout
    bt, fout, j = o_ref.shape

    # Stage 1: one fused MXU matmul for the whole batch tile and both weight banks.
    h01 = jnp.dot(x_ref[...], w_ref[...],
                  preferred_element_type=jnp.float32)        # (Bt*J, 2*Fout)
    h0 = h01[:, :fout].reshape(bt, j, fout)                  # (Bt, J, Fout)
    h1 = h01[:, fout:].reshape(bt, j, fout)                  # (Bt, J, Fout)

    # (adj*I)@h0 + (adj*(1-I))@h1 == adj@h1 + diag(adj)[:,None]*(h0 - h1)
    adj_b = jnp.broadcast_to(adj_ref[...], (bt, j, j))       # hoisted, tiny
    mixed = jnp.einsum("bij,bjo->bio", adj_b, h1,
                       preferred_element_type=jnp.float32)   # (Bt, J, Fout)
    out = mixed + d_ref[...][None] * (h0 - h1) + b_ref[...][None]

    # Fuse the module's .transpose(1, 2) into the store.
    o_ref[...] = jnp.transpose(out, (0, 2, 1)).astype(o_ref.dtype)   # (Bt, Fout, J)


def graph_conv_no_bn(x, W, adj_logits, bias, *, bt=None):
    """x: (B, J, Fin) -> (B, Fout, J) (matches torch `gconv(x).transpose(1, 2)`)."""
    B, J, Fin = x.shape
    Fout = W.shape[2]
    if bt is None:
        bt = B          # single grid step; pass a divisor of B to split across steps
    assert B % bt == 0, "batch tile must divide batch"

    # Batch-invariant preprocessing, done once per call (tiny JxJ / Fin x Fout ops):
    w_cat = jnp.concatenate([W[0], W[1]], axis=1)          # (Fin, 2*Fout)
    adj = jax.nn.softmax(adj_logits, axis=1)               # (J, J), softmax over dim=1
    d = jnp.diagonal(adj).reshape(J, 1)                    # (J, 1)
    bias2d = bias.reshape(1, Fout)
    x2 = x.reshape(B * J, Fin)                             # metadata-only reshape

    return pl.pallas_call(
        _gconv_kernel,
        out_shape=jax.ShapeDtypeStruct((B, Fout, J), jnp.float32),
        grid_spec=pltpu.PrefetchScalarGridSpec(
            num_scalar_prefetch=0,
            grid=(B // bt,),
            in_specs=[
                pl.BlockSpec((bt * J, Fin), lambda i: (i, 0)),
                pl.BlockSpec((Fin, 2 * Fout), lambda i: (0, 0)),
                pl.BlockSpec((J, J), lambda i: (0, 0)),
                pl.BlockSpec((J, 1), lambda i: (0, 0)),
                pl.BlockSpec((1, Fout), lambda i: (0, 0)),
            ],
            out_specs=pl.BlockSpec((bt, Fout, J), lambda i: (i, 0, 0)),
        ),
        compiler_params=pltpu.CompilerParams(
            dimension_semantics=("parallel",)),
    )(x2, w_cat, adj, d, bias2d)


def _reference(x, W, adj_logits, bias):
    # Faithful translation of SemGraphConv.forward + _GraphConv_no_bn.transpose(1,2).
    h0 = jnp.einsum("bjf,fo->bjo", x, W[0])
    h1 = jnp.einsum("bjf,fo->bjo", x, W[1])
    adj = jax.nn.softmax(adj_logits, axis=1)
    J = adj.shape[0]
    eye = jnp.eye(J, dtype=jnp.float32)
    out = (jnp.einsum("ij,bjo->bio", adj * eye, h0)
           + jnp.einsum("ij,bjo->bio", adj * (1.0 - eye), h1))
    out = out + bias.reshape(1, 1, -1)
    return jnp.transpose(out, (0, 2, 1))


if __name__ == "__main__":
    # Small shapes consistent with the module: B=2 batches, J=16 joints,
    # input_dim=8, output_dim=32.
    B, J, Fin, Fout = 2, 16, 8, 32

    key = jax.random.PRNGKey(0)
    k_x, k_w, k_b = jax.random.split(key, 3)

    # Adjacency: simple chain skeleton with self-loops (deterministic).
    adj_np = np.zeros((J, J), dtype=np.float32)
    for i in range(J):
        adj_np[i, i] = 1.0
        if i + 1 < J:
            adj_np[i, i + 1] = 1.0
            adj_np[i + 1, i] = 1.0
    adj_arr = jnp.asarray(adj_np)
    mask = adj_arr > 0

    # Parameters (deterministic init mirroring the module's __init__):
    # W: (2, Fin, Fout), xavier_uniform with gain=1.414
    gain = 1.414
    bound = gain * math.sqrt(6.0 / (Fin + Fout))
    W = jax.random.uniform(k_w, (2, Fin, Fout), jnp.float32, -bound, bound)
    # e: ones at each nonzero adjacency entry (nn.init.constant_(1))
    n_edges = int(mask.sum())
    e = jnp.ones((n_edges,), dtype=jnp.float32)
    # bias: uniform(-stdv, stdv), stdv = 1/sqrt(Fout)
    stdv = 1.0 / math.sqrt(Fout)
    bias = jax.random.uniform(k_b, (Fout,), jnp.float32, -stdv, stdv)

    # Masked adjacency logits: -9e15 everywhere, e at mask positions (as in torch).
    rows_idx, cols_idx = jnp.nonzero(mask, size=n_edges)
    adj_logits = jnp.full((J, J), -9000000000000000.0, dtype=jnp.float32)
    adj_logits = adj_logits.at[rows_idx, cols_idx].set(e)

    x = jax.random.normal(k_x, (B, J, Fin), jnp.float32)

    out = jax.jit(graph_conv_no_bn)(x, W, adj_logits, bias)
    out = jax.block_until_ready(out)

    ref = _reference(x, W, adj_logits, bias)
    assert out.shape == (B, Fout, J)
    assert jnp.allclose(out, ref, atol=1e-4, rtol=1e-5), (
        float(jnp.max(jnp.abs(out - ref))))

    print("KERNEL_OK")
</pallas_src>

<mosaic_0001>
module attributes {stable_mosaic.version = 11 : i64} {
  func.func @_gconv_kernel(%arg0: i32, %arg1: memref<32x8xf32, #tpu.memory_space<vmem>>, %arg2: memref<8x64xf32, #tpu.memory_space<vmem>>, %arg3: memref<16x16xf32, #tpu.memory_space<vmem>>, %arg4: memref<16x1xf32, #tpu.memory_space<vmem>>, %arg5: memref<1x32xf32, #tpu.memory_space<vmem>>, %arg6: memref<2x32x16xf32, #tpu.memory_space<vmem>>) attributes {dimension_semantics = [#tpu.dimension_semantics<parallel>], iteration_bounds = array<i64: 1>, scalar_prefetch = 0 : i64, scratch_operands = 0 : i64, tpu.core_type = #tpu.core_type<tc>, window_params = [{transform_indices = @transform_0, window_bounds = array<i64: 32, 8>}, {pipeline_mode = #tpu.pipeline_mode<synchronous>, transform_indices = @transform_1, window_bounds = array<i64: 8, 64>}, {pipeline_mode = #tpu.pipeline_mode<synchronous>, transform_indices = @transform_2, window_bounds = array<i64: 16, 16>}, {pipeline_mode = #tpu.pipeline_mode<synchronous>, transform_indices = @transform_3, window_bounds = array<i64: 16, 1>}, {pipeline_mode = #tpu.pipeline_mode<synchronous>, transform_indices = @transform_4, window_bounds = array<i64: 1, 32>}, {transform_indices = @transform_5, window_bounds = array<i64: 2, 32, 16>}]} {
    %c0 = arith.constant 0 : index
    %c0_0 = arith.constant 0 : index
    %0 = vector.load %arg1[%c0, %c0_0] : memref<32x8xf32, #tpu.memory_space<vmem>>, vector<32x8xf32>
    %c0_1 = arith.constant 0 : index
    %c0_2 = arith.constant 0 : index
    %1 = vector.load %arg2[%c0_1, %c0_2] : memref<8x64xf32, #tpu.memory_space<vmem>>, vector<8x64xf32>
    %cst = arith.constant dense<0.000000e+00> : vector<32x64xf32>
    %2 = tpu.matmul %0, %1, %cst {dimension_numbers = #tpu.dot_dimension_numbers<[1], [0], [0], [1], [0, 0, 1, 1], [], []>} : vector<32x8xf32>, vector<8x64xf32>, vector<32x64xf32> -> vector<32x64xf32>
    %3 = vector.extract_strided_slice %2 {offsets = [0, 0], sizes = [32, 32], strides = [1, 1]} : vector<32x64xf32> to vector<32x32xf32>
    %4 = vector.shape_cast %3 : vector<32x32xf32> to vector<2x16x32xf32>
    %5 = vector.extract_strided_slice %2 {offsets = [0, 32], sizes = [32, 32], strides = [1, 1]} : vector<32x64xf32> to vector<32x32xf32>
    %6 = vector.shape_cast %5 : vector<32x32xf32> to vector<2x16x32xf32>
    %c0_3 = arith.constant 0 : index
    %c0_4 = arith.constant 0 : index
    %7 = vector.load %arg3[%c0_3, %c0_4] : memref<16x16xf32, #tpu.memory_space<vmem>>, vector<16x16xf32>
    %8 = vector.shape_cast %7 : vector<16x16xf32> to vector<1x16x16xf32>
    %9 = vector.broadcast %8 : vector<1x16x16xf32> to vector<2x16x16xf32>
    "tpu.trace_start"() <{level = 10 : i32, message = "bij,bjo->bio"}> : () -> ()
    %cst_5 = arith.constant dense<0.000000e+00> : vector<2x16x32xf32>
    %10 = tpu.matmul %9, %6, %cst_5 {dimension_numbers = #tpu.dot_dimension_numbers<[2], [1], [1], [2], [0, 0, 0, 1, 1, 2], [0], [0]>} : vector<2x16x16xf32>, vector<2x16x32xf32>, vector<2x16x32xf32> -> vector<2x16x32xf32>
    "tpu.trace_stop"() : () -> ()
    %c0_6 = arith.constant 0 : index
    %c0_7 = arith.constant 0 : index
    %11 = vector.load %arg4[%c0_6, %c0_7] : memref<16x1xf32, #tpu.memory_space<vmem>>, vector<16x1xf32>
    %12 = vector.shape_cast %11 : vector<16x1xf32> to vector<1x16x1xf32>
    %13 = arith.subf %4, %6 : vector<2x16x32xf32>
    %14 = vector.broadcast %12 : vector<1x16x1xf32> to vector<2x16x32xf32>
    %15 = arith.mulf %14, %13 : vector<2x16x32xf32>
    %16 = arith.addf %10, %15 : vector<2x16x32xf32>
    %c0_8 = arith.constant 0 : index
    %c0_9 = arith.constant 0 : index
    %17 = vector.load %arg5[%c0_8, %c0_9] : memref<1x32xf32, #tpu.memory_space<vmem>>, vector<1x32xf32>
    %18 = vector.shape_cast %17 : vector<1x32xf32> to vector<1x1x32xf32>
    %19 = vector.broadcast %18 : vector<1x1x32xf32> to vector<2x16x32xf32>
    %20 = arith.addf %16, %19 : vector<2x16x32xf32>
    %21 = tpu.transpose %20, [0, 2, 1] : vector<2x16x32xf32> -> vector<2x32x16xf32>
    %c0_10 = arith.constant 0 : index
    %c0_11 = arith.constant 0 : index
    %c0_12 = arith.constant 0 : index
    %22 = vector.load %arg6[%c0_10, %c0_11, %c0_12] : memref<2x32x16xf32, #tpu.memory_space<vmem>>, vector<2x32x16xf32>
    tpu.vector_store %arg6[%c0_10, %c0_11, %c0_12], %21 {strides = array<i32>} : memref<2x32x16xf32, #tpu.memory_space<vmem>>, vector<2x32x16xf32>,
    return
  }
  func.func @transform_0(%arg0: i32) -> (i32, i32) {
    %c0_i32 = arith.constant 0 : i32
    %c0_i32_0 = arith.constant 0 : i32
    return %arg0, %c0_i32 : i32, i32
  }
  func.func @transform_1(%arg0: i32) -> (i32, i32) {
    %c0_i32 = arith.constant 0 : i32
    %c0_i32_0 = arith.constant 0 : i32
    %c0_i32_1 = arith.constant 0 : i32
    return %c0_i32, %c0_i32_0 : i32, i32
  }
  func.func @transform_2(%arg0: i32) -> (i32, i32) {
    %c0_i32 = arith.constant 0 : i32
    %c0_i32_0 = arith.constant 0 : i32
    %c0_i32_1 = arith.constant 0 : i32
    return %c0_i32, %c0_i32_0 : i32, i32
  }
  func.func @transform_3(%arg0: i32) -> (i32, i32) {
    %c0_i32 = arith.constant 0 : i32
    %c0_i32_0 = arith.constant 0 : i32
    %c0_i32_1 = arith.constant 0 : i32
    return %c0_i32, %c0_i32_0 : i32, i32
  }
  func.func @transform_4(%arg0: i32) -> (i32, i32) {
    %c0_i32 = arith.constant 0 : i32
    %c0_i32_0 = arith.constant 0 : i32
    %c0_i32_1 = arith.constant 0 : i32
    return %c0_i32, %c0_i32_0 : i32, i32
  }
  func.func @transform_5(%arg0: i32) -> (i32, i32, i32) {
    %c0_i32 = arith.constant 0 : i32
    %c0_i32_0 = arith.constant 0 : i32
    %c0_i32_1 = arith.constant 0 : i32
    return %arg0, %c0_i32, %c0_i32_0 : i32, i32, i32
  }
}

</mosaic_0001>

<llo_original>
// kernel: graph_conv_no_bn.1
$region0: #{graph_conv_no_bn.1}
  #allocation0 [shape = 'u32[]', space=smem, size = 0x4, offset = 0x4, fixed_abs, tag = 'smem constant byte address 0x4 - core index']
  #allocation1 [shape = 'u32[72,128]{1,0:T(1,128)}', space=vmem, size = 0x9000, scoped, tag = 'internal scratch']
  %s0 = inlined_call_operand.vmem [shape: f32[32,8], index: 0, kind: input, shape index: {}]
  %s1 = inlined_call_operand.vmem [shape: f32[8,64], index: 1, kind: input, shape index: {}]
  %s2 = inlined_call_operand.vmem [shape: f32[16,16], index: 2, kind: input, shape index: {}]
  %s3 = inlined_call_operand.vmem [shape: f32[16,1], index: 3, kind: input, shape index: {}]
  %s4 = inlined_call_operand.vmem [shape: f32[1,32], index: 4, kind: input, shape index: {}]
  %s5 = inlined_call_operand.vmem [shape: f32[2,32,16], index: 5, kind: output, shape index: {}]
  %s6 = sld [smem:[#allocation0]]
  $region30: #{graph_conv_no_bn.1} parent=0
    _
  %s8 = ssub.s32 1, %s6
  %s9 = scalar_select 0, %s8, %s6
  // Predicated region
  $region2: #{graph_conv_no_bn.1} parent=0 // pred_check
    _
  $region3: #{graph_conv_no_bn.1} parent=0 // pred_check_branch
    %11 = sbr.rel (0) target = $region5
  $region4: #{graph_conv_no_bn.1} parent=0 // pred_region
    _
  $region5: #{graph_conv_no_bn.1} parent=0 // pred_fallthru
    _
  // Predicated region
  $region6: #{graph_conv_no_bn.1} parent=0 // pred_check
    _
  $region7: #{graph_conv_no_bn.1} parent=0 // pred_check_branch
    %13 = sbr.rel (0) target = $region9
  $region8: #{graph_conv_no_bn.1} parent=0 // pred_region
    _
  $region9: #{graph_conv_no_bn.1} parent=0 // pred_fallthru
    _
  // Predicated region
  $region10: #{graph_conv_no_bn.1} parent=0 // pred_check
    _
  $region11: #{graph_conv_no_bn.1} parent=0 // pred_check_branch
    %15 = sbr.rel (0) target = $region13
  $region12: #{graph_conv_no_bn.1} parent=0 // pred_region
    _
  $region13: #{graph_conv_no_bn.1} parent=0 // pred_fallthru
    _
  // Predicated region
  $region14: #{graph_conv_no_bn.1} parent=0 // pred_check
    _
  $region15: #{graph_conv_no_bn.1} parent=0 // pred_check_branch
    %17 = sbr.rel (0) target = $region17
  $region16: #{graph_conv_no_bn.1} parent=0 // pred_region
    _
  $region17: #{graph_conv_no_bn.1} parent=0 // pred_fallthru
    _
  // Predicated region
  $region18: #{graph_conv_no_bn.1} parent=0 // pred_check
    _
  $region19: #{graph_conv_no_bn.1} parent=0 // pred_check_branch
    %19 = sbr.rel (0) target = $region21
  $region20: #{graph_conv_no_bn.1} parent=0 // pred_region
    _
  $region21: #{graph_conv_no_bn.1} parent=0 // pred_fallthru
    _
  %v20 = vld [vmem:[%s0] sm:$0xff]
  %v21 = vld [vmem:[%s0 + $0x8] sm:$0xff]
  %v22 = vld [vmem:[%s0 + $0x10] sm:$0xff]
  %v23 = vld [vmem:[%s0 + $0x18] sm:$0xff]
  %v24 = vld [vmem:[%s1] sm:$0xff]
  %vm25 = vcmask 64512
  %v27 = vsel %vm25, %v20, 0
  %v30 = vsel %vm25, %v21, 0
  %v33 = vsel %vm25, %v22, 0
  %v36 = vsel %vm25, %v23, 0
  %38 = vmatpush.msra.mxu0 0.0
  %39 = vmatpush.msra.mxu0 0.0
  %40 = vmatpush.msra.mxu0 0.0
  %41 = vmatpush.msra.mxu0 0.0
  %42 = vmatpush.msra.mxu0 0.0
  %43 = vmatpush.msra.mxu0 0.0
  %44 = vmatpush.msra.mxu0 0.0
  %45 = vmatpush.msra.mxu0 0.0
  %46 = vmatpush.msra.mxu0 0.0
  %47 = vmatpush.msra.mxu0 0.0
  %48 = vmatpush.msra.mxu0 0.0
  %49 = vmatpush.msra.mxu0 0.0
  %50 = vmatpush.msra.mxu0 0.0
  %51 = vmatpush.msra.mxu0 0.0
  %52 = vmatpush.msra.mxu0 0.0
  %53 = vmatpush.msra.mxu0 %v24
  %54 = vmatmul.f32.gmra.mxu0 %v27
  %v55 = vpop.f32.mrf.mxu0
  %v56 = vadd.f32 0.0, %v55
  %57 = vmatmul.f32.gmra.mxu0 %v30
  %v58 = vpop.f32.mrf.mxu0
  %v59 = vadd.f32 0.0, %v58
  %60 = vmatmul.f32.gmra.mxu0 %v33
  %v61 = vpop.f32.mrf.mxu0
  %v62 = vadd.f32 0.0, %v61
  %63 = vmatmul.f32.gmra.mxu0 %v36
  %v64 = vpop.f32.mrf.mxu0
  %v65 = vadd.f32 0.0, %v64
  %66 = vdwg.mxu0
  %v67 = vld [vmem:[%s2] sm:$0xff]
  %v68 = vld [vmem:[%s2 + $0x8] sm:$0xff]
  %v69 = vld [vmem:[%s3] sm:$0xff]
  %v70 = vld [vmem:[%s3 + $0x8] sm:$0xff]
  %75 = vrot.lane.b32.xlu0 %v56, 96
  %v76 = vpop.permute.xlu0 %75
  %77 = vrot.lane.b32.xlu0 %v59, 96
  %v78 = vpop.permute.xlu0 %77
  %79 = vrot.lane.b32.xlu0 %v62, 96
  %v80 = vpop.permute.xlu0 %79
  %81 = vrot.lane.b32.xlu0 %v65, 96
  %v82 = vpop.permute.xlu0 %81
  %v87 = vsub.f32 %v56, %v76
  %v88 = vsub.f32 %v59, %v78
  %v89 = vsub.f32 %v62, %v80
  %v90 = vsub.f32 %v65, %v82
  %92 = vset.pattern.permute.xlu0 0
  %93 = vperm.xlu0 %92, %v69
  %v94 = vpop.permute.xlu0 %93
  %97 = vset.pattern.permute.xlu0 0
  %98 = vperm.xlu0 %97, %v70
  %v99 = vpop.permute.xlu0 %98
  %v101 = vmul.f32 %v94, %v87
  %v102 = vmul.f32 %v99, %v88
  %v103 = vmul.f32 %v94, %v89
  %v104 = vmul.f32 %v99, %v90
  %vm105 = vcmask 130048
  %v107 = vsel %vm105, %v67, 0
  %v110 = vsel %vm105, %v68, 0
  %112 = vmatpush.msra.mxu0 0.0
  %113 = vmatpush.msra.mxu0 0.0
  %114 = vmatpush.msra.mxu0 0.0
  %115 = vmatpush.msra.mxu0 0.0
  %116 = vmatpush.msra.mxu0 0.0
  %117 = vmatpush.msra.mxu0 0.0
  %118 = vmatpush.msra.mxu0 0.0
  %119 = vmatpush.msra.mxu0 0.0
  %120 = vmatpush.msra.mxu0 0.0
  %121 = vmatpush.msra.mxu0 0.0
  %122 = vmatpush.msra.mxu0 0.0
  %123 = vmatpush.msra.mxu0 0.0
  %124 = vmatpush.msra.mxu0 0.0
  %125 = vmatpush.msra.mxu0 0.0
  %126 = vmatpush.msra.mxu0 %v78
  %127 = vmatpush.msra.mxu0 %v76
  %128 = vmatmul.f32.gmra.mxu0 %v107
  %v129 = vpop.f32.mrf.mxu0
  %v130 = vadd.f32 %v101, %v129
  %131 = vmatmul.f32.gmra.mxu0 %v110
  %v132 = vpop.f32.mrf.mxu0
  %v133 = vadd.f32 %v102, %v132
  %134 = vdwg.mxu0
  %135 = vmatpush.msra.mxu0 0.0
  %136 = vmatpush.msra.mxu0 0.0
  %137 = vmatpush.msra.mxu0 0.0
  %138 = vmatpush.msra.mxu0 0.0
  %139 = vmatpush.msra.mxu0 0.0
  %140 = vmatpush.msra.mxu0 0.0
  %141 = vmatpush.msra.mxu0 0.0
  %142 = vmatpush.msra.mxu0 0.0
  %143 = vmatpush.msra.mxu0 0.0
  %144 = vmatpush.msra.mxu0 0.0
  %145 = vmatpush.msra.mxu0 0.0
  %146 = vmatpush.msra.mxu0 0.0
  %147 = vmatpush.msra.mxu0 0.0
  %148 = vmatpush.msra.mxu0 0.0
  %149 = vmatpush.msra.mxu0 %v82
  %150 = vmatpush.msra.mxu0 %v80
  %151 = vmatmul.f32.gmra.mxu0 %v107
  %v152 = vpop.f32.mrf.mxu0
  %v153 = vadd.f32 %v103, %v152
  %154 = vmatmul.f32.gmra.mxu0 %v110
  %v155 = vpop.f32.mrf.mxu0
  %v156 = vadd.f32 %v104, %v155
  %157 = vdwg.mxu0
  %v158 = vld [vmem:[%s4] sm:$0x1]
  %v160 = vperm.slane %v158, 0
  %v162 = vadd.f32 %v130, %v160
  %v163 = vadd.f32 %v133, %v160
  %v164 = vadd.f32 %v153, %v160
  %v165 = vadd.f32 %v156, %v160
  %166 = vxpose.xlu0.b32.start [1/16] %v162, 128
  %167 = vxpose.xlu0.b32.cont [2/16] %v163, 128
  %168 = vxpose.xlu0.b32.cont [3/16] 0.0, 128
  %169 = vxpose.xlu0.b32.cont [4/16] 0.0, 128
  %170 = vxpose.xlu0.b32.cont [5/16] 0.0, 128
  %171 = vxpose.xlu0.b32.cont [6/16] 0.0, 128
  %172 = vxpose.xlu0.b32.cont [7/16] 0.0, 128
  %173 = vxpose.xlu0.b32.cont [8/16] 0.0, 128
  %174 = vxpose.xlu0.b32.cont [9/16] 0.0, 128
  %175 = vxpose.xlu0.b32.cont [10/16] 0.0, 128
  %176 = vxpose.xlu0.b32.cont [11/16] 0.0, 128
  %177 = vxpose.xlu0.b32.cont [12/16] 0.0, 128
  %178 = vxpose.xlu0.b32.cont [13/16] 0.0, 128
  %179 = vxpose.xlu0.b32.cont [14/16] 0.0, 128
  %180 = vxpose.xlu0.b32.cont [15/16] 0.0, 128
  %181 = vxpose.xlu0.b32.end [16/16] 0.0, 128
  %v182 = vpop.trf.xlu0
  %v183 = vpop.trf.xlu0
  %v184 = vpop.trf.xlu0
  %v185 = vpop.trf.xlu0
  %v186 = vpop.trf.xlu0
  %v187 = vpop.trf.xlu0
  %v188 = vpop.trf.xlu0
  %v189 = vpop.trf.xlu0
  %v190 = vpop.trf.xlu0
  %v191 = vpop.trf.xlu0
  %v192 = vpop.trf.xlu0
  %v193 = vpop.trf.xlu0
  %v194 = vpop.trf.xlu0
  %v195 = vpop.trf.xlu0
  %v196 = vpop.trf.xlu0
  %v197 = vpop.trf.xlu0
  %198 = vxpose.xlu0.b32.start [1/16] %v164, 128
  %199 = vxpose.xlu0.b32.cont [2/16] %v165, 128
  %200 = vxpose.xlu0.b32.cont [3/16] 0.0, 128
  %201 = vxpose.xlu0.b32.cont [4/16] 0.0, 128
  %202 = vxpose.xlu0.b32.cont [5/16] 0.0, 128
  %203 = vxpose.xlu0.b32.cont [6/16] 0.0, 128
  %204 = vxpose.xlu0.b32.cont [7/16] 0.0, 128
  %205 = vxpose.xlu0.b32.cont [8/16] 0.0, 128
  %206 = vxpose.xlu0.b32.cont [9/16] 0.0, 128
  %207 = vxpose.xlu0.b32.cont [10/16] 0.0, 128
  %208 = vxpose.xlu0.b32.cont [11/16] 0.0, 128
  %209 = vxpose.xlu0.b32.cont [12/16] 0.0, 128
  %210 = vxpose.xlu0.b32.cont [13/16] 0.0, 128
  %211 = vxpose.xlu0.b32.cont [14/16] 0.0, 128
  %212 = vxpose.xlu0.b32.cont [15/16] 0.0, 128
  %213 = vxpose.xlu0.b32.end [16/16] 0.0, 128
  %v214 = vpop.trf.xlu0
  %v215 = vpop.trf.xlu0
  %v216 = vpop.trf.xlu0
  %v217 = vpop.trf.xlu0
  %v218 = vpop.trf.xlu0
  %v219 = vpop.trf.xlu0
  %v220 = vpop.trf.xlu0
  %v221 = vpop.trf.xlu0
  %v222 = vpop.trf.xlu0
  %v223 = vpop.trf.xlu0
  %v224 = vpop.trf.xlu0
  %v225 = vpop.trf.xlu0
  %v226 = vpop.trf.xlu0
  %v227 = vpop.trf.xlu0
  %v228 = vpop.trf.xlu0
  %v229 = vpop.trf.xlu0
  %230 = vst.msk [vmem:[%s5] sm:$0xff] %vm105, %v182
  %231 = vst.msk [vmem:[%s5 + $0x8] sm:$0xff] %vm105, %v183
  %232 = vst.msk [vmem:[%s5 + $0x10] sm:$0xff] %vm105, %v184
  %233 = vst.msk [vmem:[%s5 + $0x18] sm:$0xff] %vm105, %v185
  %234 = vst.msk [vmem:[%s5 + $0x20] sm:$0xff] %vm105, %v214
  %235 = vst.msk [vmem:[%s5 + $0x28] sm:$0xff] %vm105, %v215
  %236 = vst.msk [vmem:[%s5 + $0x30] sm:$0xff] %vm105, %v216
  %237 = vst.msk [vmem:[%s5 + $0x38] sm:$0xff] %vm105, %v217
  // Predicated region
  $region22: #{graph_conv_no_bn.1} parent=0 // pred_check
    _
  $region23: #{graph_conv_no_bn.1} parent=0 // pred_check_branch
    %239 = sbr.rel (0) target = $region25
  $region24: #{graph_conv_no_bn.1} parent=0 // pred_region
    _
  $region25: #{graph_conv_no_bn.1} parent=0 // pred_fallthru
    _
  // Predicated region
  $region26: #{graph_conv_no_bn.1} parent=0 // pred_check
    _
  $region27: #{graph_conv_no_bn.1} parent=0 // pred_check_branch
    %241 = sbr.rel (0) target = $region29
  $region28: #{graph_conv_no_bn.1} parent=0 // pred_region
    _
  $region29: #{graph_conv_no_bn.1} parent=0 // pred_fallthru
    _

</llo_original>
